<compile_context>
chip_gen: v7x
topology: tpu7x:2x2x1
jax: 0.10.0
libtpu: 0.0.40
codegen_flags: <defaults>
</compile_context>

<pallas_src>
import functools

import jax
import jax.numpy as jnp
from jax.experimental import pallas as pl
from jax.experimental.pallas import tpu as pltpu


LANE = 512                         # lane-dense slab width (multiple of 128)
SUBLANE_ALIGN = 32                 # covers f32(8) / bf16(16) / int8,fp8(32)
TARGET_BLOCK_BYTES = 3 * 1024 * 1024  # x + bits + out traffic per grid step


def _round_up(n, m):
    return ((n + m - 1) // m) * m


# ---------------------------------------------------------------------------
# Kernel
# ---------------------------------------------------------------------------
def _dropout_kernel(x_ref, bits_ref, o_ref, *, threshold, scale):
    # keep with prob (1 - p):  P(bits >= p * 2^32) = 1 - p
    keep = bits_ref[...] >= jnp.uint32(threshold)
    x = x_ref[...]
    scaled = x * jnp.asarray(scale, dtype=x.dtype)       # stay in native dtype
    o_ref[...] = jnp.where(keep, scaled, jnp.zeros((), dtype=scaled.dtype))


# ---------------------------------------------------------------------------
# Wrapper
# ---------------------------------------------------------------------------
def dropout_or_identity(x, p, *, key=None, training=True):
    """Forward pass of DropoutOrIdentity on a tensor of any rank."""
    # Identity path: no kernel, no copy — exactly nn.Identity / eval dropout.
    if p is None or p == 0 or not training:
        return x
    if not (0.0 < float(p) < 1.0):
        raise ValueError(f"dropout p must be in (0, 1), got {p}")
    if key is None:
        key = jax.random.PRNGKey(0)

    orig_shape = x.shape
    orig_dtype = x.dtype
    total = x.size

    # ---- lane-dense 2-D slab + tile sizing ---------------------------------
    rows = pl.cdiv(total, LANE)
    itemsize = jnp.dtype(orig_dtype).itemsize
    bytes_per_row = LANE * (2 * itemsize + 4)             # x + out + u32 bits
    block_rows = max(
        SUBLANE_ALIGN,
        (TARGET_BLOCK_BYTES // bytes_per_row) // SUBLANE_ALIGN * SUBLANE_ALIGN,
    )
    block_rows = min(block_rows, _round_up(rows, SUBLANE_ALIGN))
    rows_padded = _round_up(rows, block_rows)
    padded_total = rows_padded * LANE

    xf = jnp.ravel(x)
    if padded_total != total:
        xf = jnp.pad(xf, (0, padded_total - total))
    x2 = xf.reshape(rows_padded, LANE)

    # Portable PRNG (works on TPU and under interpret mode).
    bits = jax.random.bits(key, (rows_padded, LANE), dtype=jnp.uint32)

    threshold = min(int(round(float(p) * 2.0 ** 32)), 2 ** 32 - 1)
    scale = 1.0 / (1.0 - float(p))

    grid = (rows_padded // block_rows,)
    kernel = functools.partial(_dropout_kernel, threshold=threshold, scale=scale)

    y2 = pl.pallas_call(
        kernel,
        out_shape=jax.ShapeDtypeStruct((rows_padded, LANE), orig_dtype),
        grid=grid,
        in_specs=[
            pl.BlockSpec((block_rows, LANE), lambda i: (i, 0)),
            pl.BlockSpec((block_rows, LANE), lambda i: (i, 0)),
        ],
        out_specs=pl.BlockSpec((block_rows, LANE), lambda i: (i, 0)),
        compiler_params=pltpu.CompilerParams(
            dimension_semantics=("parallel",),      # shard tiles across TCs (v7x)
            vmem_limit_bytes=32 * 1024 * 1024,      # safe on v5e/v6e/v7x
        ),
    )(x2, bits)

    return y2.reshape(-1)[:total].reshape(orig_shape)


# ---------------------------------------------------------------------------
# Demo / self-check
# ---------------------------------------------------------------------------
if __name__ == "__main__":
    root = jax.random.PRNGKey(0)
    xkey, dkey = jax.random.split(root)

    N, D = 16, 768                      # CHIEF-style feature vectors [N, D]
    x = jax.random.normal(xkey, (N, D), dtype=jnp.float32)

    # Identity path: p = None / 0, and eval-mode dropout.
    y_id = jax.block_until_ready(dropout_or_identity(x, p=None))
    assert jnp.array_equal(y_id, x), "identity (p=None) mismatch"
    y_ev = jax.block_until_ready(dropout_or_identity(x, p=0.5, training=False))
    assert jnp.array_equal(y_ev, x), "identity (eval mode) mismatch"

    # Dropout path: p = 0.5, training.
    p = 0.5
    y = jax.block_until_ready(dropout_or_identity(x, p=p, key=dkey, training=True))

    kept = y != 0.0
    # Survivors must equal x / (1 - p); everything else must be exactly 0.
    assert jnp.allclose(
        jnp.where(kept, y * (1.0 - p), 0.0),
        jnp.where(kept, x, 0.0),
        atol=1e-5, rtol=1e-5,
    ), "dropout scaling mismatch"
    keep_frac = float(jnp.mean(kept.astype(jnp.float32)))
    assert 0.4 < keep_frac < 0.6, f"keep fraction {keep_frac} far from 1-p"

    print("KERNEL_OK")
</pallas_src>

<mosaic_0001>
module attributes {stable_mosaic.version = 11 : i64} {
  func.func @_dropout_kernel(%arg0: i32, %arg1: memref<32x512xf32, #tpu.memory_space<vmem>>, %arg2: memref<32x512xi32, #tpu.memory_space<vmem>>, %arg3: memref<32x512xf32, #tpu.memory_space<vmem>>) attributes {dimension_semantics = [#tpu.dimension_semantics<parallel>], iteration_bounds = array<i64: 1>, scalar_prefetch = 0 : i64, scratch_operands = 0 : i64, tpu.core_type = #tpu.core_type<tc>, window_params = [{transform_indices = @transform_0, window_bounds = array<i64: 32, 512>}, {transform_indices = @transform_1, window_bounds = array<i64: 32, 512>}, {transform_indices = @transform_2, window_bounds = array<i64: 32, 512>}]} {
    %c0 = arith.constant 0 : index
    %c0_0 = arith.constant 0 : index
    %0 = vector.load %arg2[%c0, %c0_0] : memref<32x512xi32, #tpu.memory_space<vmem>>, vector<32x512xi32>
    %c-2147483648_i32 = arith.constant -2147483648 : i32
    %1 = vector.broadcast %c-2147483648_i32 : i32 to vector<32x512xi32>
    %2 = arith.cmpi uge, %0, %1 : vector<32x512xi32>
    %c0_1 = arith.constant 0 : index
    %c0_2 = arith.constant 0 : index
    %3 = vector.load %arg1[%c0_1, %c0_2] : memref<32x512xf32, #tpu.memory_space<vmem>>, vector<32x512xf32>
    %cst = arith.constant 2.000000e+00 : f32
    %4 = vector.broadcast %cst : f32 to vector<32x512xf32>
    %5 = arith.mulf %3, %4 : vector<32x512xf32>
    %cst_3 = arith.constant 0.000000e+00 : f32
    %6 = vector.broadcast %cst_3 : f32 to vector<32x512xf32>
    %7 = arith.select %2, %5, %6 : vector<32x512xi1>, vector<32x512xf32>
    %c0_4 = arith.constant 0 : index
    %c0_5 = arith.constant 0 : index
    %8 = vector.load %arg3[%c0_4, %c0_5] : memref<32x512xf32, #tpu.memory_space<vmem>>, vector<32x512xf32>
    tpu.vector_store %arg3[%c0_4, %c0_5], %7 {strides = array<i32>} : memref<32x512xf32, #tpu.memory_space<vmem>>, vector<32x512xf32>,
    return
  }
  func.func @transform_0(%arg0: i32) -> (i32, i32) {
    %c0_i32 = arith.constant 0 : i32
    %c0_i32_0 = arith.constant 0 : i32
    return %arg0, %c0_i32 : i32, i32
  }
  func.func @transform_1(%arg0: i32) -> (i32, i32) {
    %c0_i32 = arith.constant 0 : i32
    %c0_i32_0 = arith.constant 0 : i32
    return %arg0, %c0_i32 : i32, i32
  }
  func.func @transform_2(%arg0: i32) -> (i32, i32) {
    %c0_i32 = arith.constant 0 : i32
    %c0_i32_0 = arith.constant 0 : i32
    return %arg0, %c0_i32 : i32, i32
  }
}

</mosaic_0001>

<llo_original>
// kernel: tpu_custom_call.1
$region0: #{tpu_custom_call.1}
  #allocation0 [shape = 'u32[]', space=smem, size = 0x4, offset = 0x4, fixed_abs, tag = 'smem constant byte address 0x4 - core index']
  #allocation1 [shape = 'u32[144,128]{1,0:T(1,128)}', space=vmem, size = 0x12000, scoped, tag = 'internal scratch']
  %s0 = inlined_call_operand.hbm [shape: f32[32,512], index: 0, kind: input, shape index: {}]
  %s1 = inlined_call_operand.hbm [shape: u32[32,512], index: 1, kind: input, shape index: {}]
  %s2 = inlined_call_operand.hbm [shape: f32[32,512], index: 2, kind: output, shape index: {}]
  %s3 = sld [smem:[#allocation0]]
  $region26: #{tpu_custom_call.1} parent=0
    _
  %s5 = ssub.s32 1, %s3
  %s6 = scalar_select 0, %s5, %s3
  $region1: #{tpu_custom_call.1} parent=0
    #allocation2 [shape = 'u8[65536]{0}', space=vmem, size = 0x10000, scoped, tag = 'input window, operand 0, single buffered']
    #allocation3 [shape = 's32[1]{0}', space=sflag, size = 0x4, scoped, tag = 'scoped memory for tpu_custom_call.1']
    #allocation4 [shape = 's32[1]{0}', space=sflag, size = 0x4, scoped, tag = 'scoped memory for tpu_custom_call.1']
    #allocation5 [shape = 'u8[65536]{0}', space=vmem, size = 0x10000, scoped, tag = 'input window, operand 1, single buffered']
    #allocation6 [shape = 's32[1]{0}', space=sflag, size = 0x4, scoped, tag = 'scoped memory for tpu_custom_call.1']
    #allocation7 [shape = 'u8[65536]{0}', space=vmem, size = 0x10000, scoped, tag = 'output window, operand 0, single buffered']
    %7 = vsyncpa [#allocation3], 0
    %8 = vsyncpa [#allocation6], 0
    %9 = vsyncpa [#allocation4], 0
    // Predicated region
    $region2: #{tpu_custom_call.1} parent=1 // pred_check
      _
    $region3: #{tpu_custom_call.1} parent=1 // pred_check_branch
      %11 = sbr.rel (0) target = $region5
    $region4: #{tpu_custom_call.1} parent=1 // pred_region
      %s13 = ssub.s32 2048, 2048
      %14 = vsyncadd [#allocation3], %s13
      %s15 = sshll.u32 [#allocation2], 4
      %s16 = int_to_ptr.vmem [resolvable:$true] %s15
      %21 = dma.hbm_to_vmem [thread:$0]  %s0, 2048, %s16, [#allocation3], 512, 512, 32
    $region5: #{tpu_custom_call.1} parent=1 // pred_fallthru
      _
    // Predicated region
    $region6: #{tpu_custom_call.1} parent=1 // pred_check
      _
    $region7: #{tpu_custom_call.1} parent=1 // pred_check_branch
      %23 = sbr.rel (0) target = $region9
    $region8: #{tpu_custom_call.1} parent=1 // pred_region
      %s25 = ssub.s32 2048, 2048
      %26 = vsyncadd [#allocation6], %s25
      %s27 = sshll.u32 [#allocation5], 4
      %s28 = int_to_ptr.vmem [resolvable:$true] %s27
      %33 = dma.hbm_to_vmem [thread:$0]  %s1, 2048, %s28, [#allocation6], 512, 512, 32
    $region9: #{tpu_custom_call.1} parent=1 // pred_fallthru
      _
    // Predicated region
    $region10: #{tpu_custom_call.1} parent=1 // pred_check
      _
    $region11: #{tpu_custom_call.1} parent=1 // pred_check_branch
      %35 = sbr.rel (0) target = $region13
    $region12: #{tpu_custom_call.1} parent=1 // pred_region
      %36 = dma.done [#allocation3], 2048
    $region13: #{tpu_custom_call.1} parent=1 // pred_fallthru
      _
    // Predicated region
    $region14: #{tpu_custom_call.1} parent=1 // pred_check
      _
    $region15: #{tpu_custom_call.1} parent=1 // pred_check_branch
      %38 = sbr.rel (0) target = $region17
    $region16: #{tpu_custom_call.1} parent=1 // pred_region
      %39 = dma.done [#allocation6], 2048
    $region17: #{tpu_custom_call.1} parent=1 // pred_fallthru
      _
    %v40 = vld [vmem:[#allocation5] sm:$0xff]
    %v41 = vld [vmem:[#allocation5 + $0x8] sm:$0xff]
    %v42 = vld [vmem:[#allocation5 + $0x10] sm:$0xff]
    %v43 = vld [vmem:[#allocation5 + $0x18] sm:$0xff]
    %v44 = vld [vmem:[#allocation5 + $0x20] sm:$0xff]
    %v45 = vld [vmem:[#allocation5 + $0x28] sm:$0xff]
    %v46 = vld [vmem:[#allocation5 + $0x30] sm:$0xff]
    %v47 = vld [vmem:[#allocation5 + $0x38] sm:$0xff]
    %v48 = vld [vmem:[#allocation5 + $0x40] sm:$0xff]
    %v49 = vld [vmem:[#allocation5 + $0x48] sm:$0xff]
    %v50 = vld [vmem:[#allocation5 + $0x50] sm:$0xff]
    %v51 = vld [vmem:[#allocation5 + $0x58] sm:$0xff]
    %v52 = vld [vmem:[#allocation5 + $0x60] sm:$0xff]
    %v53 = vld [vmem:[#allocation5 + $0x68] sm:$0xff]
    %v54 = vld [vmem:[#allocation5 + $0x70] sm:$0xff]
    %v55 = vld [vmem:[#allocation5 + $0x78] sm:$0xff]
    %vm56 = vcmp.ge.u32.totalorder %v40, 2147483648
    %vm57 = vcmp.ge.u32.totalorder %v41, 2147483648
    %vm58 = vcmp.ge.u32.totalorder %v42, 2147483648
    %vm59 = vcmp.ge.u32.totalorder %v43, 2147483648
    %vm60 = vcmp.ge.u32.totalorder %v44, 2147483648
    %vm61 = vcmp.ge.u32.totalorder %v45, 2147483648
    %vm62 = vcmp.ge.u32.totalorder %v46, 2147483648
    %vm63 = vcmp.ge.u32.totalorder %v47, 2147483648
    %vm64 = vcmp.ge.u32.totalorder %v48, 2147483648
    %vm65 = vcmp.ge.u32.totalorder %v49, 2147483648
    %vm66 = vcmp.ge.u32.totalorder %v50, 2147483648
    %vm67 = vcmp.ge.u32.totalorder %v51, 2147483648
    %vm68 = vcmp.ge.u32.totalorder %v52, 2147483648
    %vm69 = vcmp.ge.u32.totalorder %v53, 2147483648
    %vm70 = vcmp.ge.u32.totalorder %v54, 2147483648
    %vm71 = vcmp.ge.u32.totalorder %v55, 2147483648
    %v72 = vld [vmem:[#allocation2] sm:$0xff]
    %v73 = vld [vmem:[#allocation2 + $0x8] sm:$0xff]
    %v74 = vld [vmem:[#allocation2 + $0x10] sm:$0xff]
    %v75 = vld [vmem:[#allocation2 + $0x18] sm:$0xff]
    %v76 = vld [vmem:[#allocation2 + $0x20] sm:$0xff]
    %v77 = vld [vmem:[#allocation2 + $0x28] sm:$0xff]
    %v78 = vld [vmem:[#allocation2 + $0x30] sm:$0xff]
    %v79 = vld [vmem:[#allocation2 + $0x38] sm:$0xff]
    %v80 = vld [vmem:[#allocation2 + $0x40] sm:$0xff]
    %v81 = vld [vmem:[#allocation2 + $0x48] sm:$0xff]
    %v82 = vld [vmem:[#allocation2 + $0x50] sm:$0xff]
    %v83 = vld [vmem:[#allocation2 + $0x58] sm:$0xff]
    %v84 = vld [vmem:[#allocation2 + $0x60] sm:$0xff]
    %v85 = vld [vmem:[#allocation2 + $0x68] sm:$0xff]
    %v86 = vld [vmem:[#allocation2 + $0x70] sm:$0xff]
    %v87 = vld [vmem:[#allocation2 + $0x78] sm:$0xff]
    %v88 = vmul.f32 %v72, 2.0
    %v89 = vmul.f32 %v73, 2.0
    %v90 = vmul.f32 %v74, 2.0
    %v91 = vmul.f32 %v75, 2.0
    %v92 = vmul.f32 %v76, 2.0
    %v93 = vmul.f32 %v77, 2.0
    %v94 = vmul.f32 %v78, 2.0
    %v95 = vmul.f32 %v79, 2.0
    %v96 = vmul.f32 %v80, 2.0
    %v97 = vmul.f32 %v81, 2.0
    %v98 = vmul.f32 %v82, 2.0
    %v99 = vmul.f32 %v83, 2.0
    %v100 = vmul.f32 %v84, 2.0
    %v101 = vmul.f32 %v85, 2.0
    %v102 = vmul.f32 %v86, 2.0
    %v103 = vmul.f32 %v87, 2.0
    %v104 = vsel %vm56, %v88, 0.0
    %v105 = vsel %vm57, %v89, 0.0
    %v106 = vsel %vm58, %v90, 0.0
    %v107 = vsel %vm59, %v91, 0.0
    %v108 = vsel %vm60, %v92, 0.0
    %v109 = vsel %vm61, %v93, 0.0
    %v110 = vsel %vm62, %v94, 0.0
    %v111 = vsel %vm63, %v95, 0.0
    %v112 = vsel %vm64, %v96, 0.0
    %v113 = vsel %vm65, %v97, 0.0
    %v114 = vsel %vm66, %v98, 0.0
    %v115 = vsel %vm67, %v99, 0.0
    %v116 = vsel %vm68, %v100, 0.0
    %v117 = vsel %vm69, %v101, 0.0
    %v118 = vsel %vm70, %v102, 0.0
    %v119 = vsel %vm71, %v103, 0.0
    %120 = vst [vmem:[#allocation7] sm:$0xff] %v104
    %121 = vst [vmem:[#allocation7 + $0x8] sm:$0xff] %v105
    %122 = vst [vmem:[#allocation7 + $0x10] sm:$0xff] %v106
    %123 = vst [vmem:[#allocation7 + $0x18] sm:$0xff] %v107
    %124 = vst [vmem:[#allocation7 + $0x20] sm:$0xff] %v108
    %125 = vst [vmem:[#allocation7 + $0x28] sm:$0xff] %v109
    %126 = vst [vmem:[#allocation7 + $0x30] sm:$0xff] %v110
    %127 = vst [vmem:[#allocation7 + $0x38] sm:$0xff] %v111
    %128 = vst [vmem:[#allocation7 + $0x40] sm:$0xff] %v112
    %129 = vst [vmem:[#allocation7 + $0x48] sm:$0xff] %v113
    %130 = vst [vmem:[#allocation7 + $0x50] sm:$0xff] %v114
    %131 = vst [vmem:[#allocation7 + $0x58] sm:$0xff] %v115
    %132 = vst [vmem:[#allocation7 + $0x60] sm:$0xff] %v116
    %133 = vst [vmem:[#allocation7 + $0x68] sm:$0xff] %v117
    %134 = vst [vmem:[#allocation7 + $0x70] sm:$0xff] %v118
    %135 = vst [vmem:[#allocation7 + $0x78] sm:$0xff] %v119
    // Predicated region
    $region18: #{tpu_custom_call.1} parent=1 // pred_check
      _
    $region19: #{tpu_custom_call.1} parent=1 // pred_check_branch
      %137 = sbr.rel (0) target = $region21
    $region20: #{tpu_custom_call.1} parent=1 // pred_region
      %s139 = ssub.s32 2048, 2048
      %140 = vsyncadd [#allocation4], %s139
      %s141 = sshll.u32 [#allocation7], 4
      %s142 = int_to_ptr.vmem [resolvable:$true] %s141
      %147 = dma.vmem_to_hbm [thread:$0]  %s142, 2048, %s2, [#allocation4], 512, 512, 32
    $region21: #{tpu_custom_call.1} parent=1 // pred_fallthru
      _
    // Predicated region
    $region22: #{tpu_custom_call.1} parent=1 // pred_check
      _
    $region23: #{tpu_custom_call.1} parent=1 // pred_check_branch
      %149 = sbr.rel (0) target = $region25
    $region24: #{tpu_custom_call.1} parent=1 // pred_region
      %150 = dma.done [#allocation4], 2048
    $region25: #{tpu_custom_call.1} parent=1 // pred_fallthru
      _
    %151 = vsyncpa [#allocation3], 1
    %152 = vsyncpa [#allocation6], 1
    %153 = vsyncpa [#allocation4], 1

</llo_original>
